<compile_context>
chip_gen: v6e
topology: v6e:2x2x1
jax: 0.10.0
libtpu: 0.0.40
codegen_flags: <defaults>
</compile_context>

<pallas_src>
from functools import partial

import jax
import jax.numpy as jnp
from jax.experimental import pallas as pl
from jax.experimental.pallas import tpu as pltpu


# ----------------------------------------------------------------------------
# Kernel: elementwise clamp(x, 0, thre) on one (row_block, lane) tile
# ----------------------------------------------------------------------------
def _relux_kernel(x_ref, o_ref, *, thre):
    x = x_ref[...]
    lo = jnp.zeros((), x.dtype)
    hi = jnp.full((), thre, x.dtype)          # thre in the input dtype (int-safe)
    o_ref[...] = jnp.minimum(jnp.maximum(x, lo), hi)


_LANE = 256                           # lane-dense last dim (multiple of 128)
_TARGET_TILE_BYTES = 4 * 1024 * 1024  # ~4 MiB per buffer -> ~95% of HBM roofline
_SUBLANE_MULT = 32                    # covers f32(8)/bf16(16)/int8,fp8(32) tiles
_VMEM_LIMIT = 32 * 1024 * 1024        # explicit: 2 arrays x 2 bufs x 4 MiB + slack


def _round_up(a, b):
    return ((a + b - 1) // b) * b


def relux(x, thre=8.0, *, donate_input=False):
    """Pallas TPU ReLUX: clamp(x, 0, thre) for any shape, keeps dtype."""
    orig_shape = x.shape
    dtype = x.dtype
    n = x.size
    if n == 0:
        return x

    flat = x.reshape(-1)

    # Pick a lane-dense last dim that divides n exactly to avoid padding copies.
    if n % _LANE == 0:
        lane = _LANE
    elif n % 128 == 0:
        lane = 128
    else:
        lane = _LANE
    pad = (-n) % lane
    if pad:
        # Rare ragged tail (n not a multiple of 128).  Padded elements are
        # inert (clamp(0)=0) and sliced off below.
        # TODO(synk): handle the ragged tail in-kernel to avoid this HBM copy.
        flat = jnp.pad(flat, (0, pad))
    rows = flat.size // lane
    x2 = flat.reshape(rows, lane)

    # Dtype-aware row block targeting ~4 MiB per tile, multiple of 32 rows.
    itemsize = jnp.dtype(dtype).itemsize
    rb = max(_SUBLANE_MULT, _TARGET_TILE_BYTES // (lane * itemsize))
    rb = _round_up(rb, _SUBLANE_MULT)

    if rows <= rb:
        row_block = rows               # single block == full extent (always legal)
        grid = 1
    else:
        row_block = rb
        grid = pl.cdiv(rows, row_block)
        # Keep the block count even so a 2-TC chip (v7x) splits the axis evenly.
        if grid % 2 == 1:
            row_block = _round_up(pl.cdiv(rows, grid + 1), _SUBLANE_MULT)
            grid = pl.cdiv(rows, row_block)

    extra = {"input_output_aliases": {0: 0}} if donate_input else {}
    out2 = pl.pallas_call(
        partial(_relux_kernel, thre=thre),
        out_shape=jax.ShapeDtypeStruct((rows, lane), dtype),
        grid_spec=pltpu.PrefetchScalarGridSpec(
            num_scalar_prefetch=0,
            grid=(grid,),
            in_specs=[pl.BlockSpec((row_block, lane), lambda i: (i, 0))],
            out_specs=pl.BlockSpec((row_block, lane), lambda i: (i, 0)),
        ),
        compiler_params=pltpu.CompilerParams(
            dimension_semantics=("parallel",),
            vmem_limit_bytes=_VMEM_LIMIT,
        ),
        **extra,
    )(x2)

    out = out2.reshape(-1)
    if pad:
        out = out[:n]
    return out.reshape(orig_shape)


# ----------------------------------------------------------------------------
if __name__ == "__main__":
    key = jax.random.PRNGKey(0)
    k0, k1, k2 = jax.random.split(key, 3)

    fwd = jax.jit(partial(relux, thre=8.0))

    # 1) small conv-activation style input: (B=2, C=4, H=16, W=16), f32
    x = 10.0 * jax.random.normal(k0, (2, 4, 16, 16), jnp.float32)
    y = fwd(x)
    jax.block_until_ready(y)
    ref = jnp.clip(x, 0.0, 8.0)
    assert y.shape == x.shape and y.dtype == x.dtype
    assert bool(jnp.max(jnp.abs(y - ref)) == 0.0)

    # 2) small ragged shape, bf16 (exercises pad fallback + dtype handling)
    xb = (12.0 * jax.random.normal(k1, (3, 5, 7, 11), jnp.float32)).astype(jnp.bfloat16)
    yb = fwd(xb)
    jax.block_until_ready(yb)
    refb = jnp.clip(xb, jnp.bfloat16(0), jnp.bfloat16(8))
    assert yb.shape == xb.shape and yb.dtype == xb.dtype
    assert bool(jnp.all(yb == refb))

    # 3) modest 2-D input that needs multiple grid blocks + a partial boundary
    xl = 10.0 * jax.random.normal(k2, (9000, 256), jnp.float32)
    yl = fwd(xl)
    jax.block_until_ready(yl)
    refl = jnp.clip(xl, 0.0, 8.0)
    assert bool(jnp.max(jnp.abs(yl - refl)) == 0.0)

    print("KERNEL_OK")
</pallas_src>

<mosaic_0001>
module attributes {stable_mosaic.version = 11 : i64} {
  func.func @_relux_kernel(%arg0: i32, %arg1: memref<8x256xf32, #tpu.memory_space<vmem>>, %arg2: memref<8x256xf32, #tpu.memory_space<vmem>>) attributes {dimension_semantics = [#tpu.dimension_semantics<parallel>], iteration_bounds = array<i64: 1>, scalar_prefetch = 0 : i64, scratch_operands = 0 : i64, tpu.core_type = #tpu.core_type<tc>, window_params = [{transform_indices = @transform_0, window_bounds = array<i64: 8, 256>}, {transform_indices = @transform_1, window_bounds = array<i64: 8, 256>}]} {
    %c0 = arith.constant 0 : index
    %c0_0 = arith.constant 0 : index
    %0 = vector.load %arg1[%c0, %c0_0] : memref<8x256xf32, #tpu.memory_space<vmem>>, vector<8x256xf32>
    %cst = arith.constant 0.000000e+00 : f32
    %1 = vector.broadcast %cst : f32 to vector<8x256xf32>
    %2 = arith.maximumf %0, %1 : vector<8x256xf32>
    %cst_1 = arith.constant 8.000000e+00 : f32
    %3 = vector.broadcast %cst_1 : f32 to vector<8x256xf32>
    %4 = arith.minimumf %2, %3 : vector<8x256xf32>
    %c0_2 = arith.constant 0 : index
    %c0_3 = arith.constant 0 : index
    %5 = vector.load %arg2[%c0_2, %c0_3] : memref<8x256xf32, #tpu.memory_space<vmem>>, vector<8x256xf32>
    tpu.vector_store %arg2[%c0_2, %c0_3], %4 {strides = array<i32>} : memref<8x256xf32, #tpu.memory_space<vmem>>, vector<8x256xf32>,
    return
  }
  func.func @transform_0(%arg0: i32) -> (i32, i32) {
    %c0_i32 = arith.constant 0 : i32
    %c0_i32_0 = arith.constant 0 : i32
    return %arg0, %c0_i32 : i32, i32
  }
  func.func @transform_1(%arg0: i32) -> (i32, i32) {
    %c0_i32 = arith.constant 0 : i32
    %c0_i32_0 = arith.constant 0 : i32
    return %arg0, %c0_i32 : i32, i32
  }
}

</mosaic_0001>

<llo_original>
// kernel: relux.1
$region0: #{relux.1}
  #allocation0 [shape = 'u32[]', space=smem, size = 0x4, offset = 0x4, fixed_abs, tag = 'smem constant byte address 0x4 - core index']
  #allocation1 [shape = 'u32[144,128]{1,0:T(1,128)}', space=vmem, size = 0x12000, scoped, tag = 'internal scratch']
  %s0 = inlined_call_operand.vmem [shape: f32[8,256], index: 0, kind: input, shape index: {}]
  %s1 = inlined_call_operand.vmem [shape: f32[8,256], index: 1, kind: output, shape index: {}]
  %s2 = sld [smem:[#allocation0]]
  $region14: #{relux.1} parent=0
    _
  %s4 = ssub.s32 1, %s2
  %s5 = scalar_select 0, %s4, %s2
  // Predicated region
  $region2: #{relux.1} parent=0 // pred_check
    _
  $region3: #{relux.1} parent=0 // pred_check_branch
    %7 = sbr.rel (0) target = $region5
  $region4: #{relux.1} parent=0 // pred_region
    _
  $region5: #{relux.1} parent=0 // pred_fallthru
    _
  %v8 = vld [vmem:[%s0] sm:$0xff]
  %v9 = vld [vmem:[%s0 + $0x8] sm:$0xff]
  %v10 = vmax.f32 %v8, 0.0
  %v11 = vmax.f32 %v9, 0.0
  %v12 = vmin.f32 %v10, 8.0
  %v13 = vmin.f32 %v11, 8.0
  %14 = vst [vmem:[%s1] sm:$0xff] %v12
  %15 = vst [vmem:[%s1 + $0x8] sm:$0xff] %v13
  // Predicated region
  $region6: #{relux.1} parent=0 // pred_check
    _
  $region7: #{relux.1} parent=0 // pred_check_branch
    %17 = sbr.rel (0) target = $region9
  $region8: #{relux.1} parent=0 // pred_region
    _
  $region9: #{relux.1} parent=0 // pred_fallthru
    _
  // Predicated region
  $region10: #{relux.1} parent=0 // pred_check
    _
  $region11: #{relux.1} parent=0 // pred_check_branch
    %19 = sbr.rel (0) target = $region13
  $region12: #{relux.1} parent=0 // pred_region
    _
  $region13: #{relux.1} parent=0 // pred_fallthru
    _

</llo_original>
